<compile_context>
chip_gen: v5e
topology: v5e:2x2
jax: 0.10.0
libtpu: 0.0.40
codegen_flags: <defaults>
</compile_context>

<pallas_src>
import jax
import jax.numpy as jnp
from jax.experimental import pallas as pl
from jax.experimental.pallas import tpu as pltpu


def _cdiv(a, b):
    return -(-a // b)


def _sublane_multiple(dtype):
    # Sub-32-bit dtypes pack along sublanes: 8 rows for 4-byte, 16 for 2-byte,
    # 32 for 1-byte elements.
    return {4: 8, 2: 16, 1: 32}.get(jnp.dtype(dtype).itemsize, 8)


# ---------------------------------------------------------------------------
# Primary path: aliased no-op pass-through (zero HBM traffic in the kernel).
# ---------------------------------------------------------------------------
def _passthrough_kernel(x_ref, o_ref):
    del x_ref                # output is aliased to the input; nothing to move
    pltpu.touch(o_ref)       # fake read/write so the aliased output materializes


def _aliased_passthrough(x):
    return pl.pallas_call(
        _passthrough_kernel,
        out_shape=jax.ShapeDtypeStruct(x.shape, x.dtype),
        in_specs=[pl.BlockSpec(memory_space=pl.ANY)],
        out_specs=pl.BlockSpec(memory_space=pl.ANY),
        input_output_aliases={0: 0},
    )(x)


# ---------------------------------------------------------------------------
# Fallback path: streaming lane-dense tiled copy (near HBM roofline).
# ---------------------------------------------------------------------------
def _copy_kernel(x_ref, o_ref):
    o_ref[...] = x_ref[...]


def _lane_dense_layout(shape5d, dtype, max_lane_bytes=64 * 1024,
                       target_block_bytes=2 * 1024 * 1024):
    """Pick a lane-dense 2D factorization (rows, lane) of the 5D tensor plus a
    row tile: lane is a large multiple of 128 when possible (unmasked vst),
    blocks are ~2 MiB, and the grid has >= 2 blocks whenever rows allow it."""
    N, C, D, H, W = shape5d
    itemsize = jnp.dtype(dtype).itemsize
    sub = _sublane_multiple(dtype)
    total = N * C * D * H * W
    max_lane = max(128, max_lane_bytes // itemsize)

    lane = None
    if total % 128 == 0:
        largest = None
        for mult in range(max_lane // 128, 0, -1):
            cand = 128 * mult
            if total % cand:
                continue
            if largest is None:
                largest = cand               # largest mult-of-128 divisor seen
            if total // cand >= 2 * sub:     # leave enough rows for >= 2 blocks
                lane = cand
                break
        if lane is None:
            lane = largest                   # tiny tensor: single fat block
    if lane is None:
        # total not a multiple of 128: fold trailing dims until the lane extent
        # reaches 128 (block spans the full extent, so the (8,128) rule is
        # satisfied either way and stores stay as wide as possible).
        for rows_c, lane_c in ((N * C * D, H * W), (N * C, D * H * W),
                               (N, C * D * H * W), (1, total)):
            if lane_c >= 128 or rows_c == 1:
                lane = lane_c
                break
    rows = total // lane

    # Row tile: ~target_block_bytes per block, dtype-aware sublane multiple.
    max_rows = max(1, target_block_bytes // (lane * itemsize))
    tile_rows = min(rows, max(sub, (max_rows // sub) * sub))
    if tile_rows >= rows and rows > sub:
        # Whole slab would fit one block: split in two so both v7x TCs get work.
        half = _cdiv(rows, 2)
        tile_rows = min(rows, max(sub, _cdiv(half, sub) * sub))
    return rows, lane, tile_rows


def _streaming_copy(x5d):
    rows, lane, tile_rows = _lane_dense_layout(x5d.shape, x5d.dtype)
    x2d = x5d.reshape(rows, lane)                              # metadata-only
    spec = pl.BlockSpec((tile_rows, lane), lambda i: (i, 0))   # identity map
    out2d = pl.pallas_call(
        _copy_kernel,
        out_shape=jax.ShapeDtypeStruct((rows, lane), x5d.dtype),
        grid_spec=pltpu.PrefetchScalarGridSpec(
            num_scalar_prefetch=0,
            grid=(_cdiv(rows, tile_rows),),
            in_specs=[spec],
            out_specs=spec,
        ),
        input_output_aliases={0: 0},          # reuse the input HBM allocation
        compiler_params=pltpu.CompilerParams(
            dimension_semantics=("parallel",),  # load-bearing only on v7x (2 TCs)
        ),
    )(x2d)
    return out2d


def height_compression_pallas(spatial_features_5d, *, force_copy=False):
    """(N, C, D, H, W) -> (N, C*D, H, W).

    Zero-copy aliased pass-through by default; streaming lane-dense Pallas copy
    as a fallback (or when force_copy=True, used for testing)."""
    N, C, D, H, W = spatial_features_5d.shape
    out_shape = (N, C * D, H, W)
    if not force_copy:
        try:
            x_bev = spatial_features_5d.reshape(out_shape)     # metadata-only
            return _aliased_passthrough(x_bev)
        except Exception:
            # Aliased no-op path unavailable on this jax/libtpu combination:
            # fall back to the streaming copy below.
            pass
    out2d = _streaming_copy(spatial_features_5d)
    return out2d.reshape(out_shape)


class HeightCompression:
    """JAX/Pallas port of pcdet HeightCompression (map_to_bev)."""

    def __init__(self, model_cfg, **kwargs):
        self.model_cfg = model_cfg
        self.num_bev_features = self.model_cfg["NUM_BEV_FEATURES"]

    def forward(self, batch_dict):
        # encoded_spconv_tensor is provided already densified to (N, C, D, H, W);
        # the sparse .dense() scatter lives in plain-JAX glue (see __main__).
        spatial_features_5d = batch_dict["encoded_spconv_tensor"]
        batch_dict["spatial_features"] = height_compression_pallas(spatial_features_5d)
        batch_dict["spatial_features_stride"] = batch_dict[
            "encoded_spconv_tensor_stride"
        ]
        return batch_dict


if __name__ == "__main__":
    key = jax.random.PRNGKey(0)

    # Small shapes: N=2 batch, C=4 channels, D=2 depth (height) bins, H=W=16.
    N, C, D, H, W = 2, 4, 2, 16, 16
    num_bev_features = C * D  # 8

    # --- glue: emulate SparseConvTensor.dense() with a deterministic scatter.
    # Coordinates are sampled WITHOUT replacement so the scatter has no
    # duplicate indices (duplicate-index .set ordering is unspecified in JAX).
    k_feat, k_idx = jax.random.split(key)
    num_voxels = 32
    feats = jax.random.normal(k_feat, (num_voxels, C), dtype=jnp.float32)
    flat = jax.random.choice(k_idx, N * D * H * W, shape=(num_voxels,), replace=False)
    n_i = flat // (D * H * W)
    rem = flat % (D * H * W)
    d_i = rem // (H * W)
    rem = rem % (H * W)
    h_i = rem // W
    w_i = rem % W
    dense = jnp.zeros((N, C, D, H, W), dtype=jnp.float32)
    dense = dense.at[n_i, :, d_i, h_i, w_i].set(feats)

    batch_dict = {
        "encoded_spconv_tensor": dense,
        "encoded_spconv_tensor_stride": 8,
    }

    module = HeightCompression({"NUM_BEV_FEATURES": num_bev_features})
    out_dict = module.forward(batch_dict)
    spatial_features = jax.block_until_ready(out_dict["spatial_features"])

    # Verify against the pure-JAX reference of the PyTorch .view().
    ref = dense.reshape(N, C * D, H, W)
    assert spatial_features.shape == (N, num_bev_features, H, W)
    assert spatial_features.dtype == jnp.float32
    assert out_dict["spatial_features_stride"] == 8
    assert jnp.array_equal(spatial_features, ref)

    # Also exercise the explicit streaming-copy fallback path.
    copy_out = jax.block_until_ready(
        height_compression_pallas(dense, force_copy=True))
    assert jnp.array_equal(copy_out, ref)

    # And a shape whose row count is not divisible by the row tile, so the
    # copy path exercises a partial last block (OOB write masking).
    dense2 = jax.random.normal(jax.random.PRNGKey(1), (2, 4, 2, 16, 18),
                               dtype=jnp.float32)
    ref2 = dense2.reshape(2, 8, 16, 18)
    copy_out2 = jax.block_until_ready(
        height_compression_pallas(dense2, force_copy=True))
    assert copy_out2.shape == (2, 8, 16, 18)
    assert jnp.array_equal(copy_out2, ref2)

    print("KERNEL_OK")
</pallas_src>

<mosaic_0001>
module attributes {stable_mosaic.version = 11 : i64} {
  func.func @_passthrough_kernel(%arg0: memref<2x8x16x16xf32, #tpu.memory_space<any>>, %arg1: memref<2x8x16x16xf32, #tpu.memory_space<any>>) attributes {dimension_semantics = [], scalar_prefetch = 0 : i64, scratch_operands = 0 : i64, tpu.core_type = #tpu.core_type<tc>} {
    return
  }
}

module attributes {stable_mosaic.version = 11 : i64} {
  func.func @_copy_kernel(%arg0: i32, %arg1: memref<8x256xf32, #tpu.memory_space<vmem>>, %arg2: memref<8x256xf32, #tpu.memory_space<vmem>>) attributes {dimension_semantics = [#tpu.dimension_semantics<parallel>], iteration_bounds = array<i64: 2>, scalar_prefetch = 0 : i64, scratch_operands = 0 : i64, tpu.core_type = #tpu.core_type<tc>, window_params = [{transform_indices = @transform_0, window_bounds = array<i64: 8, 256>}, {transform_indices = @transform_1, window_bounds = array<i64: 8, 256>}]} {
    %c0 = arith.constant 0 : index
    %c0_0 = arith.constant 0 : index
    %0 = vector.load %arg1[%c0, %c0_0] : memref<8x256xf32, #tpu.memory_space<vmem>>, vector<8x256xf32>
    %c0_1 = arith.constant 0 : index
    %c0_2 = arith.constant 0 : index
    %1 = vector.load %arg2[%c0_1, %c0_2] : memref<8x256xf32, #tpu.memory_space<vmem>>, vector<8x256xf32>
    tpu.vector_store %arg2[%c0_1, %c0_2], %0 {strides = array<i32>} : memref<8x256xf32, #tpu.memory_space<vmem>>, vector<8x256xf32>,
    return
  }
  func.func @transform_0(%arg0: i32) -> (i32, i32) {
    %c0_i32 = arith.constant 0 : i32
    %c0_i32_0 = arith.constant 0 : i32
    return %arg0, %c0_i32 : i32, i32
  }
  func.func @transform_1(%arg0: i32) -> (i32, i32) {
    %c0_i32 = arith.constant 0 : i32
    %c0_i32_0 = arith.constant 0 : i32
    return %arg0, %c0_i32 : i32, i32
  }
}

</mosaic_0001>

<llo_original>
// kernel: tpu_custom_call.1
$region0: #{tpu_custom_call.1}
  #allocation0 [shape = 'u32[]', space=smem, size = 0x4, offset = 0x4, fixed_abs, tag = 'smem constant byte address 0x4 - core index']
  #allocation1 [shape = 'u32[72,128]{1,0:T(1,128)}', space=vmem, size = 0x9000, scoped, tag = 'internal scratch']
  %s0 = inlined_call_operand.hbm [shape: f32[2,8,16,16], index: 0, kind: input, shape index: {}, may-alias: {0,1}]
  %s1 = inlined_call_operand.hbm [shape: f32[2,8,16,16], index: 1, kind: output, shape index: {}, may-alias: {0,1}]
  %s2 = sld [smem:[#allocation0]]
  $region2: #{tpu_custom_call.1} parent=0
    _
  %s4 = ssub.s32 1, %s2
  %s5 = scalar_select 0, %s4, %s2

// kernel: tpu_custom_call.1
$region0: #{tpu_custom_call.1}
  #allocation0 [shape = 'u32[]', space=smem, size = 0x4, offset = 0x4, fixed_abs, tag = 'smem constant byte address 0x4 - core index']
  #allocation1 [shape = 'u32[72,128]{1,0:T(1,128)}', space=vmem, size = 0x9000, scoped, tag = 'internal scratch']
  %s0 = inlined_call_operand.hbm [shape: f32[16,256], index: 0, kind: input, shape index: {}, may-alias: {0,1}]
  %s1 = inlined_call_operand.hbm [shape: f32[16,256], index: 1, kind: output, shape index: {}, may-alias: {0,1}]
  %s2 = sld [smem:[#allocation0]]
  $region41: #{tpu_custom_call.1} parent=0
    _
  %s4 = ssub.s32 1, %s2
  %s5 = scalar_select 0, %s4, %s2
  $region1: #{tpu_custom_call.1} parent=0
    #allocation2 [shape = 'u8[16384]{0}', space=vmem, size = 0x4000, scoped, tag = 'input window, operand 0']
    #allocation3 [shape = 's32[2]{0}', space=sflag, size = 0x8, scoped, tag = 'scoped memory for tpu_custom_call.1']
    #allocation4 [shape = 's32[2]{0}', space=sflag, size = 0x8, scoped, tag = 'scoped memory for tpu_custom_call.1']
    #allocation5 [shape = 'u8[16384]{0}', space=vmem, size = 0x4000, scoped, tag = 'output window, operand 0']
    %6 = vsyncpa [#allocation3], 0
    %s7 = scalar_lea.sflag [#allocation3], 1
    %8 = vsyncpa %s7, 0
    %9 = vsyncpa [#allocation4], 0
    %s10 = scalar_lea.sflag [#allocation4], 1
    %11 = vsyncpa %s10, 0
    loop: start=0, step=1, limit=4
    $region2: #{tpu_custom_call.1} parent=1 // loop_pre_header
      _
    $region3: #{tpu_custom_call.1} parent=1 // loop_header
      %s13 = sphi 0, %s17
      %p14 = scmp.ge.s32.totalorder %s13, 4
      %s23 = sphi 0, %s25
      %s26 = sphi 0, %s23
      %s27 = sphi 0, %s26
      %s43 = sphi 0, %s27
      %s49 = sphi 0, %s51
      %s52 = sphi 0, %s49
      %s53 = sphi 0, %s52
      %s69 = sphi 0, %s53
    $region4: #{tpu_custom_call.1} parent=1 // loop_header_branch
      %16 = sbr.rel (%p14) target = $region8
    $region5: #{tpu_custom_call.1} parent=1 // loop_body
      %s18 = ssub.s32 %s13, 1
      %s19 = ssub.s32 %s13, 2
      %s20 = sadd.s32 %s13, 1
      %s21 = ssub.s32 %s13, %s20
      %p22 = scmp.eq.s32.totalorder %s21, 0
      %s24 = sadd.s32 %s23, 1
      %s25 = scalar_select %p22, %s23, %s24
      %p28 = pneg %p22
      %p29 = scmp.eq.s32.totalorder %s13, 1
      %p30 = por %p28, %p29
      %p31 = scmp.ne.s32.totalorder %s23, %s26
      %p32 = scmp.eq.s32.totalorder %s13, 0
      %p33 = por %p31, %p32
      %p34 = scmp.ne.s32.totalorder %s23, %s26
      %p35 = scmp.eq.s32.totalorder %s18, 1
      %p36 = por %p34, %p35
      %p37 = scmp.ne.s32.totalorder %s26, %s27
      %p38 = scmp.eq.s32.totalorder %s18, 0
      %p39 = por %p37, %p38
      %p40 = scmp.ne.s32.totalorder %s26, %s27
      %p41 = scmp.eq.s32.totalorder %s19, 1
      %p42 = por %p40, %p41
      %p44 = scmp.ne.s32.totalorder %s27, %s43
      %p45 = scmp.eq.s32.totalorder %s19, 0
      %p46 = por %p44, %p45
      %s47 = ssub.s32 %s13, %s20
      %p48 = scmp.eq.s32.totalorder %s47, 0
      %s50 = sadd.s32 %s49, 1
      %s51 = scalar_select %p48, %s49, %s50
      %p54 = pneg %p48
      %p55 = scmp.eq.s32.totalorder %s13, 1
      %p56 = por %p54, %p55
      %p57 = scmp.ne.s32.totalorder %s49, %s52
      %p58 = scmp.eq.s32.totalorder %s13, 0
      %p59 = por %p57, %p58
      %p60 = scmp.ne.s32.totalorder %s49, %s52
      %p61 = scmp.eq.s32.totalorder %s18, 1
      %p62 = por %p60, %p61
      %p63 = scmp.ne.s32.totalorder %s52, %s53
      %p64 = scmp.eq.s32.totalorder %s18, 0
      %p65 = por %p63, %p64
      %p66 = scmp.ne.s32.totalorder %s52, %s53
      %p67 = scmp.eq.s32.totalorder %s19, 1
      %p68 = por %p66, %p67
      %p70 = scmp.ne.s32.totalorder %s53, %s69
      %p71 = scmp.eq.s32.totalorder %s19, 0
      %p72 = por %p70, %p71
      %p73 = scmp.le.s32.totalorder 1, %s13
      %p74 = scmp.lt.s32.totalorder %s13, 3
      %p75 = pnand %p73, %p74
      %p76 = pneg %p75
      // Predicated region
      $region9: #{tpu_custom_call.1} parent=5 // pred_check
        _
      $region10: #{tpu_custom_call.1} parent=5 // pred_check_branch
        %78 = sbr.rel (%p75) target = $region12
      $region11: #{tpu_custom_call.1} parent=5 // pred_region
        %s79 = ssub.s32 %s13, 1
      $region12: #{tpu_custom_call.1} parent=5 // pred_fallthru
        _
      %p80 = scmp.lt.s32.totalorder %s13, 2
      // Predicated region
      $region13: #{tpu_custom_call.1} parent=5 // pred_check
        %p81 = pneg %p80
      $region14: #{tpu_custom_call.1} parent=5 // pred_check_branch
        %83 = sbr.rel (%p81) target = $region16
      $region15: #{tpu_custom_call.1} parent=5 // pred_region
        // Predicated region
        $region17: #{tpu_custom_call.1} parent=15 // pred_check
          %p84 = pneg %p33
        $region18: #{tpu_custom_call.1} parent=15 // pred_check_branch
          %86 = sbr.rel (%p84) target = $region20
        $region19: #{tpu_custom_call.1} parent=15 // pred_region
          %s87 = sand.u32 %s23, 1
          %s88 = scalar_lea.sflag [#allocation3], %s87
          %s89 = sand.u32 %s23, 1
          %s90 = smul.addr %s89, 16
          %s91 = scalar_lea.vmem [#allocation2], %s90
          %93 = vsyncadd %s88, 0
          %s94 = smul.addr %s13, 2
          %s95 = smul.addr %s94, 8
          %s96 = scalar_lea.hbm %s0, %s95
          %s98 = sshll.u32 %s96, 4
          %s99 = int_to_ptr.hbm [resolvable:$true] %s98
          %s100 = sshll.u32 %s91, 4
          %s101 = int_to_ptr.vmem [resolvable:$true] %s100
          %103 = dma.hbm_to_vmem [thread:$0]  %s99, 256, %s101, %s88
        $region20: #{tpu_custom_call.1} parent=15 // pred_fallthru
          _
      $region16: #{tpu_custom_call.1} parent=5 // pred_fallthru
        _
      %p104 = scmp.le.s32.totalorder 1, %s13
      %p105 = scmp.lt.s32.totalorder %s13, 3
      %p106 = pnand %p104, %p105
      %p107 = pneg %p106
      // Predicated region
      $region21: #{tpu_custom_call.1} parent=5 // pred_check
        _
      $region22: #{tpu_custom_call.1} parent=5 // pred_check_branch
        %109 = sbr.rel (%p106) target = $region24
      $region23: #{tpu_custom_call.1} parent=5 // pred_region
        %s110 = ssub.s32 %s13, 1
        %s111 = sand.u32 %s26, 1
        %s112 = scalar_lea.sflag [#allocation3], %s111
        %s113 = sand.u32 %s26, 1
        %s114 = smul.addr %s113, 16
        %s115 = scalar_lea.vmem [#allocation2], %s114
        // Predicated region
        $region25: #{tpu_custom_call.1} parent=23 // pred_check
          %p116 = pneg %p39
        $region26: #{tpu_custom_call.1} parent=23 // pred_check_branch
          %118 = sbr.rel (%p116) target = $region28
        $region27: #{tpu_custom_call.1} parent=23 // pred_region
          %120 = dma.done %s112, 256
        $region28: #{tpu_custom_call.1} parent=23 // pred_fallthru
          _
        %s121 = sand.u32 %s26, 1
        %s122 = scalar_lea.sflag [#allocation3], %s121
        %s123 = sand.u32 %s26, 1
        %s124 = smul.addr %s123, 16
        %s125 = scalar_lea.vmem [#allocation2], %s124
        %p126 = pneg %p39
        %p127 = pneg %p36
        %p128 = pneg %p65
        %p129 = pneg %p62
        %s130 = sand.u32 %s52, 1
        %s131 = scalar_lea.sflag [#allocation4], %s130
        %s132 = sand.u32 %s52, 1
        %s133 = smul.addr %s132, 16
        %s134 = scalar_lea.vmem [#allocation5], %s133
        %v135 = vld [vmem:[%s115] sm:$0xff]
        %v136 = vld [vmem:[%s115 + $0x8] sm:$0xff]
        %137 = vst [vmem:[%s134] sm:$0xff] %v135
        %138 = vst [vmem:[%s134 + $0x8] sm:$0xff] %v136
        %s139 = sand.u32 %s52, 1
        %s140 = scalar_lea.sflag [#allocation4], %s139
        %s141 = sand.u32 %s52, 1
        %s142 = smul.addr %s141, 16
        %s143 = scalar_lea.vmem [#allocation5], %s142
        // Predicated region
        $region29: #{tpu_custom_call.1} parent=23 // pred_check
          %p144 = pneg %p62
        $region30: #{tpu_custom_call.1} parent=23 // pred_check_branch
          %146 = sbr.rel (%p144) target = $region32
        $region31: #{tpu_custom_call.1} parent=23 // pred_region
          %148 = vsyncadd %s140, 0
          %s149 = smul.addr %s18, 2
          %s150 = smul.addr %s149, 8
          %s151 = scalar_lea.hbm %s1, %s150
          %s153 = sshll.u32 %s143, 4
          %s154 = int_to_ptr.vmem [resolvable:$true] %s153
          %s155 = sshll.u32 %s151, 4
          %s156 = int_to_ptr.hbm [resolvable:$true] %s155
          %158 = dma.vmem_to_hbm [thread:$0]  %s154, 256, %s156, %s140
        $region32: #{tpu_custom_call.1} parent=23 // pred_fallthru
          _
      $region24: #{tpu_custom_call.1} parent=5 // pred_fallthru
        _
      %p159 = scmp.le.s32.totalorder 2, %s13
      // Predicated region
      $region33: #{tpu_custom_call.1} parent=5 // pred_check
        %p160 = pneg %p159
      $region34: #{tpu_custom_call.1} parent=5 // pred_check_branch
        %162 = sbr.rel (%p160) target = $region36
      $region35: #{tpu_custom_call.1} parent=5 // pred_region
        %s163 = ssub.s32 %s13, 2
        // Predicated region
        $region37: #{tpu_custom_call.1} parent=35 // pred_check
          %p164 = pneg %p68
        $region38: #{tpu_custom_call.1} parent=35 // pred_check_branch
          %166 = sbr.rel (%p164) target = $region40
        $region39: #{tpu_custom_call.1} parent=35 // pred_region
          %s167 = sand.u32 %s53, 1
          %s168 = scalar_lea.sflag [#allocation4], %s167
          %s169 = sand.u32 %s53, 1
          %s170 = smul.addr %s169, 16
          %s171 = scalar_lea.vmem [#allocation5], %s170
          %173 = dma.done %s168, 256
        $region40: #{tpu_custom_call.1} parent=35 // pred_fallthru
          _
      $region36: #{tpu_custom_call.1} parent=5 // pred_fallthru
        _
    $region6: #{tpu_custom_call.1} parent=1 // loop_footer
      %s17 = sadd.s32 1, %s13
    $region7: #{tpu_custom_call.1} parent=1 // loop_footer_branch
      %12 = sbr.rel target = $region3
    $region8: #{tpu_custom_call.1} parent=1 // loop_exit
      _
    %174 = vsyncpa [#allocation3], 1
    %s175 = scalar_lea.sflag [#allocation3], 1
    %176 = vsyncpa %s175, 1
    %177 = vsyncpa [#allocation4], 1
    %s178 = scalar_lea.sflag [#allocation4], 1
    %179 = vsyncpa %s178, 1

</llo_original>
